<compile_context>
chip_gen: v7x
topology: tpu7x:2x2x1
jax: 0.10.0
libtpu: 0.0.40
codegen_flags: <defaults>
</compile_context>

<pallas_src>
import functools

import jax
import jax.numpy as jnp
import numpy as np
from jax.experimental import pallas as pl
from jax.experimental.pallas import tpu as pltpu

IN_DIM = 2      # module contract: input is 2-D cartesian points
PACK = 8        # samples packed per vreg row
TBR_MAX = 512   # packed rows per tile  (=> 4096 samples per tile)


def _make_mlp_kernel(num_layers: int):
    """Kernel factory: statically unrolled MLP over `num_layers` packed Linear layers."""

    def kernel(*refs):
        x_ref = refs[0]
        o_ref = refs[-1]
        wb = refs[1:-1]

        h = x_ref[...]                                   # [tbr, PACK*IN_DIM]
        for li in range(num_layers):
            w = wb[2 * li][...]                          # block-diagonal packed weight
            b = wb[2 * li + 1][...]                      # tiled packed bias
            h = jnp.dot(h, w, preferred_element_type=jnp.float32) + b
            if li < num_layers - 1:
                h = jnp.tanh(h)                          # activation_fn_hidden='tanh'
            # activation_fn_output is None -> no output activation
        o_ref[...] = h

    return kernel


def init_params(key, bits_per_symbol: int, hidden_layers=(16,)):
    """Mirrors the PyTorch init: W ~ U(-1/sqrt(fan_in), 1/sqrt(fan_in)), b = 0.01.
       Weights are stored [in, out] (x @ W convention), unpadded."""
    num_classes = 2 ** bits_per_symbol
    layer_dims = [IN_DIM] + list(hidden_layers) + [num_classes]
    params = []
    for i in range(len(layer_dims) - 1):
        fan_in, fan_out = layer_dims[i], layer_dims[i + 1]
        key, wk = jax.random.split(key)
        y = 1.0 / np.sqrt(fan_in)
        w = jax.random.uniform(wk, (fan_in, fan_out), jnp.float32, -y, y)
        b = jnp.full((fan_out,), 0.01, jnp.float32)
        params.append((w, b))
    return params, layer_dims


def pack_params(params, layer_dims, pack: int = PACK):
    """Block-diagonal packing so `pack` samples share each vreg row.

    For layer li with per-sample shapes [din, dout] (padded to din_p, dout_p):
      W_packed[s*din_p : s*din_p+din, s*dout_p : s*dout_p+dout] = W
      b_packed[0,       s*dout_p : s*dout_p+dout]               = b
    Hidden widths are padded to a multiple of 16 so pack*width is a multiple of
    128 lanes; padded slots stay exactly zero (required for exactness).
    NOTE: must be re-run whenever the underlying weights change.
    """
    n_bounds = len(layer_dims)

    def pad_width(i):
        if i == 0:
            return IN_DIM                       # input: 2 per sample, no pad
        if i == n_bounds - 1:
            return layer_dims[i]                # output: num_classes, no pad
        return ((layer_dims[i] + 15) // 16) * 16  # hidden: lane-align per sample

    packed = []
    for li, (w, b) in enumerate(params):
        din, dout = layer_dims[li], layer_dims[li + 1]
        din_p, dout_p = pad_width(li), pad_width(li + 1)
        wp = jnp.zeros((pack * din_p, pack * dout_p), jnp.float32)
        bp = jnp.zeros((1, pack * dout_p), jnp.float32)
        for s in range(pack):
            wp = wp.at[s * din_p:s * din_p + din, s * dout_p:s * dout_p + dout].set(w)
            bp = bp.at[0, s * dout_p:s * dout_p + dout].set(b)
        packed.extend([wp, bp])
    return tuple(packed)


@functools.partial(jax.jit, static_argnames=("num_classes",))
def neural_forward(x, packed_params, num_classes: int):
    """x: [n, 2] float32 -> logits [n, num_classes] float32."""
    num_layers = len(packed_params) // 2
    n = x.shape[0]
    in_w = PACK * IN_DIM
    out_w = PACK * num_classes

    # Packed rows (8 samples / row), padded so the sublane dim is a multiple of 8.
    n_rows = -(-n // PACK)
    n_rows8 = ((n_rows + 7) // 8) * 8

    # Tile selection: big enough (~4096 samples) to amortize the ~0.35us/step
    # overhead, but keep >= 2 grid steps once there's enough work (>=1024
    # samples) so the "parallel" axis can shard across v7x's two TensorCores.
    if n_rows8 >= 128:
        tbr = min(TBR_MAX, ((-(-n_rows8 // 2) + 7) // 8) * 8)
    else:
        tbr = n_rows8
    n_rows_pad = (-(-n_rows8 // tbr)) * tbr
    n_pad = n_rows_pad * PACK

    x = x.astype(jnp.float32)
    x_pad = jnp.zeros((n_pad, IN_DIM), jnp.float32).at[:n].set(x)
    x_packed = x_pad.reshape(n_rows_pad, in_w)          # free contiguous reshape

    in_specs = [pl.BlockSpec((tbr, in_w), lambda i: (i, 0))]
    for li in range(num_layers):
        w_shape = packed_params[2 * li].shape
        b_shape = packed_params[2 * li + 1].shape
        in_specs.append(pl.BlockSpec(w_shape, lambda i: (0, 0)))   # weight, resident
        in_specs.append(pl.BlockSpec(b_shape, lambda i: (0, 0)))   # bias,   resident

    # Advisory scheduling hint (packed-layer flop/byte counts).
    flops = 0
    transcendentals = 0
    param_bytes = 0
    for li in range(num_layers):
        w_shape = packed_params[2 * li].shape
        flops += 2 * n_rows_pad * w_shape[0] * w_shape[1]
        if li < num_layers - 1:
            transcendentals += n_rows_pad * w_shape[1]
        param_bytes += 4 * int(np.prod(w_shape)) + 4 * int(np.prod(packed_params[2 * li + 1].shape))
    bytes_accessed = 4 * n_rows_pad * (in_w + out_w) + param_bytes

    out_packed = pl.pallas_call(
        _make_mlp_kernel(num_layers),
        out_shape=jax.ShapeDtypeStruct((n_rows_pad, out_w), jnp.float32),
        grid=(n_rows_pad // tbr,),
        in_specs=in_specs,
        out_specs=pl.BlockSpec((tbr, out_w), lambda i: (i, 0)),
        compiler_params=pltpu.CompilerParams(dimension_semantics=("parallel",)),
        cost_estimate=pl.CostEstimate(flops=flops, transcendentals=transcendentals,
                                      bytes_accessed=bytes_accessed),
    )(x_packed, *packed_params)

    # (n_rows_pad, 8*num_classes) -> (n_pad, num_classes): free contiguous reshape.
    return out_packed.reshape(n_pad, num_classes)[:n]


def _reference(x, params):
    """Pure-JAX reference using the raw (unpacked) weights."""
    h = x.astype(jnp.float32)
    for i, (w, b) in enumerate(params):
        h = h @ w + b
        if i < len(params) - 1:
            h = jnp.tanh(h)
    return h


if __name__ == "__main__":
    bits_per_symbol = 2            # num_classes = 4
    hidden_layers = (16,)
    num_classes = 2 ** bits_per_symbol

    key = jax.random.PRNGKey(0)
    pkey, xkey1, xkey2, xkey3 = jax.random.split(key, 4)

    params, layer_dims = init_params(pkey, bits_per_symbol, hidden_layers)
    packed_params = pack_params(params, layer_dims)

    # Small case: single grid step, heavy batch padding (16 -> 64 samples).
    n_small = 16
    x_small = jax.random.normal(xkey1, (n_small, 2), jnp.float32)
    out_small = jax.block_until_ready(neural_forward(x_small, packed_params, num_classes))
    ref_small = _reference(x_small, params)
    assert out_small.shape == (n_small, num_classes)
    assert np.allclose(np.asarray(out_small), np.asarray(ref_small), atol=1e-5, rtol=1e-5)

    # Mid case: non-multiple-of-tile, exercises the >=2-tile split path.
    n_mid = 1037
    x_mid = jax.random.normal(xkey2, (n_mid, 2), jnp.float32)
    out_mid = jax.block_until_ready(neural_forward(x_mid, packed_params, num_classes))
    ref_mid = _reference(x_mid, params)
    assert out_mid.shape == (n_mid, num_classes)
    assert np.allclose(np.asarray(out_mid), np.asarray(ref_mid), atol=1e-5, rtol=1e-5)

    # Larger case: exercises the TBR_MAX clamp and a multi-tile grid.
    n_big = 9000
    x_big = jax.random.normal(xkey3, (n_big, 2), jnp.float32)
    out_big = jax.block_until_ready(neural_forward(x_big, packed_params, num_classes))
    ref_big = _reference(x_big, params)
    assert out_big.shape == (n_big, num_classes)
    assert np.allclose(np.asarray(out_big), np.asarray(ref_big), atol=1e-5, rtol=1e-5)

    # TODO(synk): l1_loss / l2_loss are training-side parameter-norm helpers, not
    # part of the forward pass, so they are not implemented as Pallas kernels.
    print("KERNEL_OK")
</pallas_src>

<mosaic_0001>
module attributes {stable_mosaic.version = 11 : i64} {
  func.func @kernel(%arg0: i32, %arg1: memref<8x16xf32, #tpu.memory_space<vmem>>, %arg2: memref<16x128xf32, #tpu.memory_space<vmem>>, %arg3: memref<1x128xf32, #tpu.memory_space<vmem>>, %arg4: memref<128x32xf32, #tpu.memory_space<vmem>>, %arg5: memref<1x32xf32, #tpu.memory_space<vmem>>, %arg6: memref<8x32xf32, #tpu.memory_space<vmem>>) attributes {dimension_semantics = [#tpu.dimension_semantics<parallel>], iteration_bounds = array<i64: 1>, scalar_prefetch = 0 : i64, scratch_operands = 0 : i64, tpu.core_type = #tpu.core_type<tc>, window_params = [{transform_indices = @transform_0, window_bounds = array<i64: 8, 16>}, {pipeline_mode = #tpu.pipeline_mode<synchronous>, transform_indices = @transform_1, window_bounds = array<i64: 16, 128>}, {pipeline_mode = #tpu.pipeline_mode<synchronous>, transform_indices = @transform_2, window_bounds = array<i64: 1, 128>}, {pipeline_mode = #tpu.pipeline_mode<synchronous>, transform_indices = @transform_3, window_bounds = array<i64: 128, 32>}, {pipeline_mode = #tpu.pipeline_mode<synchronous>, transform_indices = @transform_4, window_bounds = array<i64: 1, 32>}, {transform_indices = @transform_5, window_bounds = array<i64: 8, 32>}]} {
    %c0 = arith.constant 0 : index
    %c0_0 = arith.constant 0 : index
    %0 = vector.load %arg1[%c0, %c0_0] : memref<8x16xf32, #tpu.memory_space<vmem>>, vector<8x16xf32>
    %c0_1 = arith.constant 0 : index
    %c0_2 = arith.constant 0 : index
    %1 = vector.load %arg2[%c0_1, %c0_2] : memref<16x128xf32, #tpu.memory_space<vmem>>, vector<16x128xf32>
    %c0_3 = arith.constant 0 : index
    %c0_4 = arith.constant 0 : index
    %2 = vector.load %arg3[%c0_3, %c0_4] : memref<1x128xf32, #tpu.memory_space<vmem>>, vector<1x128xf32>
    %cst = arith.constant dense<0.000000e+00> : vector<8x128xf32>
    %3 = tpu.matmul %0, %1, %cst {dimension_numbers = #tpu.dot_dimension_numbers<[1], [0], [0], [1], [0, 0, 1, 1], [], []>} : vector<8x16xf32>, vector<16x128xf32>, vector<8x128xf32> -> vector<8x128xf32>
    %4 = vector.broadcast %2 : vector<1x128xf32> to vector<8x128xf32>
    %5 = arith.addf %3, %4 : vector<8x128xf32>
    %6 = math.tanh %5 : vector<8x128xf32>
    %c0_5 = arith.constant 0 : index
    %c0_6 = arith.constant 0 : index
    %7 = vector.load %arg4[%c0_5, %c0_6] : memref<128x32xf32, #tpu.memory_space<vmem>>, vector<128x32xf32>
    %c0_7 = arith.constant 0 : index
    %c0_8 = arith.constant 0 : index
    %8 = vector.load %arg5[%c0_7, %c0_8] : memref<1x32xf32, #tpu.memory_space<vmem>>, vector<1x32xf32>
    %cst_9 = arith.constant dense<0.000000e+00> : vector<8x32xf32>
    %9 = tpu.matmul %6, %7, %cst_9 {dimension_numbers = #tpu.dot_dimension_numbers<[1], [0], [0], [1], [0, 0, 1, 1], [], []>} : vector<8x128xf32>, vector<128x32xf32>, vector<8x32xf32> -> vector<8x32xf32>
    %10 = vector.broadcast %8 : vector<1x32xf32> to vector<8x32xf32>
    %11 = arith.addf %9, %10 : vector<8x32xf32>
    %c0_10 = arith.constant 0 : index
    %c0_11 = arith.constant 0 : index
    %12 = vector.load %arg6[%c0_10, %c0_11] : memref<8x32xf32, #tpu.memory_space<vmem>>, vector<8x32xf32>
    tpu.vector_store %arg6[%c0_10, %c0_11], %11 {strides = array<i32>} : memref<8x32xf32, #tpu.memory_space<vmem>>, vector<8x32xf32>,
    return
  }
  func.func @transform_0(%arg0: i32) -> (i32, i32) {
    %c0_i32 = arith.constant 0 : i32
    %c0_i32_0 = arith.constant 0 : i32
    return %arg0, %c0_i32 : i32, i32
  }
  func.func @transform_1(%arg0: i32) -> (i32, i32) {
    %c0_i32 = arith.constant 0 : i32
    %c0_i32_0 = arith.constant 0 : i32
    %c0_i32_1 = arith.constant 0 : i32
    return %c0_i32, %c0_i32_0 : i32, i32
  }
  func.func @transform_2(%arg0: i32) -> (i32, i32) {
    %c0_i32 = arith.constant 0 : i32
    %c0_i32_0 = arith.constant 0 : i32
    %c0_i32_1 = arith.constant 0 : i32
    return %c0_i32, %c0_i32_0 : i32, i32
  }
  func.func @transform_3(%arg0: i32) -> (i32, i32) {
    %c0_i32 = arith.constant 0 : i32
    %c0_i32_0 = arith.constant 0 : i32
    %c0_i32_1 = arith.constant 0 : i32
    return %c0_i32, %c0_i32_0 : i32, i32
  }
  func.func @transform_4(%arg0: i32) -> (i32, i32) {
    %c0_i32 = arith.constant 0 : i32
    %c0_i32_0 = arith.constant 0 : i32
    %c0_i32_1 = arith.constant 0 : i32
    return %c0_i32, %c0_i32_0 : i32, i32
  }
  func.func @transform_5(%arg0: i32) -> (i32, i32) {
    %c0_i32 = arith.constant 0 : i32
    %c0_i32_0 = arith.constant 0 : i32
    return %arg0, %c0_i32 : i32, i32
  }
}

</mosaic_0001>

<llo_original>
// kernel: neural_forward.1
$region0: #{neural_forward.1}
  #allocation0 [shape = 'u32[]', space=smem, size = 0x4, offset = 0x4, fixed_abs, tag = 'smem constant byte address 0x4 - core index']
  #allocation1 [shape = 'u32[144,128]{1,0:T(1,128)}', space=vmem, size = 0x12000, scoped, tag = 'internal scratch']
  %s0 = inlined_call_operand.vmem [shape: f32[8,16], index: 0, kind: input, shape index: {}]
  %s1 = inlined_call_operand.vmem [shape: f32[16,128], index: 1, kind: input, shape index: {}]
  %s2 = inlined_call_operand.vmem [shape: f32[1,128], index: 2, kind: input, shape index: {}]
  %s3 = inlined_call_operand.vmem [shape: f32[128,32], index: 3, kind: input, shape index: {}]
  %s4 = inlined_call_operand.vmem [shape: f32[1,32], index: 4, kind: input, shape index: {}]
  %s5 = inlined_call_operand.vmem [shape: f32[8,32], index: 5, kind: output, shape index: {}]
  %s6 = sld [smem:[#allocation0]]
  $region30: #{neural_forward.1} parent=0
    _
  %s8 = ssub.s32 1, %s6
  %s9 = scalar_select 0, %s8, %s6
  // Predicated region
  $region2: #{neural_forward.1} parent=0 // pred_check
    _
  $region3: #{neural_forward.1} parent=0 // pred_check_branch
    %11 = sbr.rel (0) target = $region5
  $region4: #{neural_forward.1} parent=0 // pred_region
    _
  $region5: #{neural_forward.1} parent=0 // pred_fallthru
    _
  // Predicated region
  $region6: #{neural_forward.1} parent=0 // pred_check
    _
  $region7: #{neural_forward.1} parent=0 // pred_check_branch
    %13 = sbr.rel (0) target = $region9
  $region8: #{neural_forward.1} parent=0 // pred_region
    _
  $region9: #{neural_forward.1} parent=0 // pred_fallthru
    _
  // Predicated region
  $region10: #{neural_forward.1} parent=0 // pred_check
    _
  $region11: #{neural_forward.1} parent=0 // pred_check_branch
    %15 = sbr.rel (0) target = $region13
  $region12: #{neural_forward.1} parent=0 // pred_region
    _
  $region13: #{neural_forward.1} parent=0 // pred_fallthru
    _
  // Predicated region
  $region14: #{neural_forward.1} parent=0 // pred_check
    _
  $region15: #{neural_forward.1} parent=0 // pred_check_branch
    %17 = sbr.rel (0) target = $region17
  $region16: #{neural_forward.1} parent=0 // pred_region
    _
  $region17: #{neural_forward.1} parent=0 // pred_fallthru
    _
  // Predicated region
  $region18: #{neural_forward.1} parent=0 // pred_check
    _
  $region19: #{neural_forward.1} parent=0 // pred_check_branch
    %19 = sbr.rel (0) target = $region21
  $region20: #{neural_forward.1} parent=0 // pred_region
    _
  $region21: #{neural_forward.1} parent=0 // pred_fallthru
    _
  %v20 = vld [vmem:[%s0] sm:$0xff]
  %v21 = vld [vmem:[%s1] sm:$0xff]
  %v22 = vld [vmem:[%s1 + $0x8] sm:$0xff]
  %v23 = vld [vmem:[%s2] sm:$0x1]
  %v25 = vlaneseq
  %v26 = vshrl.u32 %v25, 7
  %v27 = vsub.s32 0, %v26
  %v28 = vrot.slane %v23, %v27
  %vm30 = vcmask 130048
  %v32 = vsel %vm30, %v20, 0
  %34 = vmatprep.subr.mxu0 0.0
  %35 = vmatpush1.msra.mxu0 %v21
  %36 = vmatprep.subr.mxu0 0.0
  %37 = vmatpush1.msra.mxu0 %v22
  %38 = vmatprep.subr.mxu0 0.0
  %39 = vmatpush1.msra.mxu0 0.0
  %40 = vmatprep.subr.mxu0 0.0
  %41 = vmatpush1.msra.mxu0 0.0
  %42 = vmatprep.subr.mxu0 0.0
  %43 = vmatpush1.msra.mxu0 0.0
  %44 = vmatprep.subr.mxu0 0.0
  %45 = vmatpush1.msra.mxu0 0.0
  %46 = vmatprep.subr.mxu0 0.0
  %47 = vmatpush1.msra.mxu0 0.0
  %48 = vmatprep.subr.mxu0 0.0
  %49 = vmatpush1.msra.mxu0 0.0
  %50 = vmatprep.subr.mxu0 0.0
  %51 = vmatpush1.msra.mxu0 0.0
  %52 = vmatprep.subr.mxu0 0.0
  %53 = vmatpush1.msra.mxu0 0.0
  %54 = vmatprep.subr.mxu0 0.0
  %55 = vmatpush1.msra.mxu0 0.0
  %56 = vmatprep.subr.mxu0 0.0
  %57 = vmatpush1.msra.mxu0 0.0
  %58 = vmatprep.subr.mxu0 0.0
  %59 = vmatpush1.msra.mxu0 0.0
  %60 = vmatprep.subr.mxu0 0.0
  %61 = vmatpush1.msra.mxu0 0.0
  %62 = vmatprep.subr.mxu0 0.0
  %63 = vmatpush1.msra.mxu0 0.0
  %64 = vmatprep.subr.mxu0 0.0
  %65 = vmatpush1.msra.mxu0 0.0
  %66 = vmatprep.subr.mxu0 0.0
  %67 = vmatpush1.msra.mxu0 0.0
  %68 = vmatprep.subr.mxu0 0.0
  %69 = vmatpush1.msra.mxu0 0.0
  %70 = vmatprep.subr.mxu0 0.0
  %71 = vmatpush1.msra.mxu0 0.0
  %72 = vmatprep.subr.mxu0 0.0
  %73 = vmatpush1.msra.mxu0 0.0
  %74 = vmatprep.subr.mxu0 0.0
  %75 = vmatpush1.msra.mxu0 0.0
  %76 = vmatprep.subr.mxu0 0.0
  %77 = vmatpush1.msra.mxu0 0.0
  %78 = vmatprep.subr.mxu0 0.0
  %79 = vmatpush1.msra.mxu0 0.0
  %80 = vmatprep.subr.mxu0 0.0
  %81 = vmatpush1.msra.mxu0 0.0
  %82 = vmatprep.subr.mxu0 0.0
  %83 = vmatpush1.msra.mxu0 0.0
  %84 = vmatprep.subr.mxu0 0.0
  %85 = vmatpush1.msra.mxu0 0.0
  %86 = vmatprep.subr.mxu0 0.0
  %87 = vmatpush1.msra.mxu0 0.0
  %88 = vmatprep.subr.mxu0 0.0
  %89 = vmatpush1.msra.mxu0 0.0
  %90 = vmatprep.subr.mxu0 0.0
  %91 = vmatpush1.msra.mxu0 0.0
  %92 = vmatprep.subr.mxu0 0.0
  %93 = vmatpush1.msra.mxu0 0.0
  %94 = vmatprep.subr.mxu0 0.0
  %95 = vmatpush1.msra.mxu0 0.0
  %96 = vmatprep.subr.mxu0 0.0
  %97 = vmatpush1.msra.mxu0 0.0
  %98 = vmatprep.mubr.f32.mxu0 0.0
  %99 = vmatmul.mubr.f32.gmra.mrb[0].mxu0 %v32
  %v100 = vpop.f32.mrb[0].mxu0
  %v101 = vadd.f32 %v28, %v100
  %v102 = vpop.f32.mrb[0].mxu0
  %103 = vdwg.mxu0
  %v104 = vtanh.pop %v101
  %v105 = vld [vmem:[%s3] sm:$0xff]
  %v106 = vld [vmem:[%s3 + $0x8] sm:$0xff]
  %v107 = vld [vmem:[%s3 + $0x10] sm:$0xff]
  %v108 = vld [vmem:[%s3 + $0x18] sm:$0xff]
  %v109 = vld [vmem:[%s3 + $0x20] sm:$0xff]
  %v110 = vld [vmem:[%s3 + $0x28] sm:$0xff]
  %v111 = vld [vmem:[%s3 + $0x30] sm:$0xff]
  %v112 = vld [vmem:[%s3 + $0x38] sm:$0xff]
  %v113 = vld [vmem:[%s3 + $0x40] sm:$0xff]
  %v114 = vld [vmem:[%s3 + $0x48] sm:$0xff]
  %v115 = vld [vmem:[%s3 + $0x50] sm:$0xff]
  %v116 = vld [vmem:[%s3 + $0x58] sm:$0xff]
  %v117 = vld [vmem:[%s3 + $0x60] sm:$0xff]
  %v118 = vld [vmem:[%s3 + $0x68] sm:$0xff]
  %v119 = vld [vmem:[%s3 + $0x70] sm:$0xff]
  %v120 = vld [vmem:[%s3 + $0x78] sm:$0xff]
  %v121 = vld [vmem:[%s4] sm:$0x1]
  %v123 = vlaneseq
  %v124 = vshrl.u32 %v123, 7
  %v125 = vsub.s32 0, %v124
  %v126 = vrot.slane %v121, %v125
  %128 = vmatprep.subr.mxu0 0.0
  %129 = vmatpush1.msra.mxu0 %v105
  %130 = vmatprep.subr.mxu0 0.0
  %131 = vmatpush1.msra.mxu0 %v106
  %132 = vmatprep.subr.mxu0 0.0
  %133 = vmatpush1.msra.mxu0 %v107
  %134 = vmatprep.subr.mxu0 0.0
  %135 = vmatpush1.msra.mxu0 %v108
  %136 = vmatprep.subr.mxu0 0.0
  %137 = vmatpush1.msra.mxu0 %v109
  %138 = vmatprep.subr.mxu0 0.0
  %139 = vmatpush1.msra.mxu0 %v110
  %140 = vmatprep.subr.mxu0 0.0
  %141 = vmatpush1.msra.mxu0 %v111
  %142 = vmatprep.subr.mxu0 0.0
  %143 = vmatpush1.msra.mxu0 %v112
  %144 = vmatprep.subr.mxu0 0.0
  %145 = vmatpush1.msra.mxu0 %v113
  %146 = vmatprep.subr.mxu0 0.0
  %147 = vmatpush1.msra.mxu0 %v114
  %148 = vmatprep.subr.mxu0 0.0
  %149 = vmatpush1.msra.mxu0 %v115
  %150 = vmatprep.subr.mxu0 0.0
  %151 = vmatpush1.msra.mxu0 %v116
  %152 = vmatprep.subr.mxu0 0.0
  %153 = vmatpush1.msra.mxu0 %v117
  %154 = vmatprep.subr.mxu0 0.0
  %155 = vmatpush1.msra.mxu0 %v118
  %156 = vmatprep.subr.mxu0 0.0
  %157 = vmatpush1.msra.mxu0 %v119
  %158 = vmatprep.subr.mxu0 0.0
  %159 = vmatpush1.msra.mxu0 %v120
  %160 = vmatprep.subr.mxu0 0.0
  %161 = vmatpush1.msra.mxu0 0.0
  %162 = vmatprep.subr.mxu0 0.0
  %163 = vmatpush1.msra.mxu0 0.0
  %164 = vmatprep.subr.mxu0 0.0
  %165 = vmatpush1.msra.mxu0 0.0
  %166 = vmatprep.subr.mxu0 0.0
  %167 = vmatpush1.msra.mxu0 0.0
  %168 = vmatprep.subr.mxu0 0.0
  %169 = vmatpush1.msra.mxu0 0.0
  %170 = vmatprep.subr.mxu0 0.0
  %171 = vmatpush1.msra.mxu0 0.0
  %172 = vmatprep.subr.mxu0 0.0
  %173 = vmatpush1.msra.mxu0 0.0
  %174 = vmatprep.subr.mxu0 0.0
  %175 = vmatpush1.msra.mxu0 0.0
  %176 = vmatprep.subr.mxu0 0.0
  %177 = vmatpush1.msra.mxu0 0.0
  %178 = vmatprep.subr.mxu0 0.0
  %179 = vmatpush1.msra.mxu0 0.0
  %180 = vmatprep.subr.mxu0 0.0
  %181 = vmatpush1.msra.mxu0 0.0
  %182 = vmatprep.subr.mxu0 0.0
  %183 = vmatpush1.msra.mxu0 0.0
  %184 = vmatprep.subr.mxu0 0.0
  %185 = vmatpush1.msra.mxu0 0.0
  %186 = vmatprep.subr.mxu0 0.0
  %187 = vmatpush1.msra.mxu0 0.0
  %188 = vmatprep.subr.mxu0 0.0
  %189 = vmatpush1.msra.mxu0 0.0
  %190 = vmatprep.subr.mxu0 0.0
  %191 = vmatpush1.msra.mxu0 0.0
  %192 = vmatprep.mubr.f32.mxu0 0.0
  %193 = vmatmul.mubr.f32.gmra.mrb[0].mxu0 %v104
  %v194 = vpop.f32.mrb[0].mxu0
  %v195 = vadd.f32 %v126, %v194
  %v196 = vpop.f32.mrb[0].mxu0
  %197 = vdwg.mxu0
  %vm198 = vcmask 261120
  %199 = vst.msk [vmem:[%s5] sm:$0xff] %vm198, %v195
  // Predicated region
  $region22: #{neural_forward.1} parent=0 // pred_check
    _
  $region23: #{neural_forward.1} parent=0 // pred_check_branch
    %201 = sbr.rel (0) target = $region25
  $region24: #{neural_forward.1} parent=0 // pred_region
    _
  $region25: #{neural_forward.1} parent=0 // pred_fallthru
    _
  // Predicated region
  $region26: #{neural_forward.1} parent=0 // pred_check
    _
  $region27: #{neural_forward.1} parent=0 // pred_check_branch
    %203 = sbr.rel (0) target = $region29
  $region28: #{neural_forward.1} parent=0 // pred_region
    _
  $region29: #{neural_forward.1} parent=0 // pred_fallthru
    _

</llo_original>
